<compile_context>
chip_gen: v5e
topology: v5e:2x2
jax: 0.10.0
libtpu: 0.0.40
codegen_flags: <defaults>
</compile_context>

<pallas_src>
import functools

import jax
import jax.numpy as jnp
from jax.experimental import pallas as pl
from jax.experimental.pallas import tpu as pltpu


def _quantile_loss_kernel(taus_ref, y_pred_ref, y_true_ref, out_ref, *, inv_q):
    # taus_ref:   (1, Q)  f32 VMEM (constant across grid steps)
    # y_pred_ref: (bt, Q) native dtype VMEM
    # y_true_ref: (bt, 1) native dtype VMEM
    # out_ref:    (bt, 1) f32 VMEM
    taus = taus_ref[...]                                  # (1, Q)
    y_pred = y_pred_ref[...].astype(jnp.float32)          # (bt, Q)
    y_true = y_true_ref[...].astype(jnp.float32)          # (bt, 1)

    d = y_true - y_pred                                   # (bt, Q), lane-broadcast
    # max(tau*d, (tau-1)*d) == tau*d + max(-d, 0)   (exact identity for any tau)
    loss = taus * d + jnp.maximum(-d, 0.0)                # (bt, Q)
    # mean over quantiles == lane-sum * (1/Q), 1/Q is a compile-time constant.
    out_ref[...] = jnp.sum(loss, axis=1, keepdims=True) * inv_q


def _round_up(x, m):
    return ((x + m - 1) // m) * m


def comparison_quantile_loss(y_pred_raw, y_true_raw, taus, *, batch_tile=8192):
    """Pallas implementation of ComparisonQuantileLoss.forward.

    Args:
      y_pred_raw: (B, Q) predicted quantiles (any float dtype).
      y_true_raw: (B, 1) true values.
      taus:       (Q,)   quantile levels.

    Returns:
      (B, 1) float32 per-sample loss.
    """
    B, Q = y_pred_raw.shape
    assert y_true_raw.shape == (B, 1)
    assert taus.shape == (Q,)

    # Batch tile: multiple of 8 sublanes (use multiples of 16/32 for bf16/int8
    # inputs; the 8192 default already is).
    bt = max(8, (int(batch_tile) // 8) * 8)
    # Keep >= 2 grid steps for big batches so the "parallel" axis can shard
    # across v7x's two TensorCores.
    if B >= 512:
        bt = min(bt, _round_up(pl.cdiv(B, 2), 8))
    if bt >= B:
        bt = B  # single block covering the whole (possibly non-multiple-of-8) batch
    num_tiles = pl.cdiv(B, bt)

    taus_row = taus.astype(jnp.float32).reshape(1, Q)
    kernel = functools.partial(_quantile_loss_kernel, inv_q=1.0 / Q)

    return pl.pallas_call(
        kernel,
        out_shape=jax.ShapeDtypeStruct((B, 1), jnp.float32),
        grid_spec=pltpu.PrefetchScalarGridSpec(
            num_scalar_prefetch=0,
            grid=(num_tiles,),
            in_specs=[
                # taus: tiny, constant index_map -> no re-DMA across grid steps.
                pl.BlockSpec((1, Q), lambda i: (0, 0)),
                # y_pred tile: contiguous HBM read (Q is the full minor dim).
                pl.BlockSpec((bt, Q), lambda i: (i, 0)),
                # y_true tile.
                pl.BlockSpec((bt, 1), lambda i: (i, 0)),
            ],
            out_specs=pl.BlockSpec((bt, 1), lambda i: (i, 0)),
        ),
        compiler_params=pltpu.CompilerParams(
            dimension_semantics=("parallel",),
            vmem_limit_bytes=32 * 1024 * 1024,
        ),
    )(taus_row, y_pred_raw, y_true_raw)


def _reference(y_pred_raw, y_true_raw, taus):
    taus = taus.reshape(1, -1)
    diff = y_true_raw.astype(jnp.float32) - y_pred_raw.astype(jnp.float32)
    loss = jnp.maximum(taus * diff, (taus - 1.0) * diff)
    return jnp.mean(loss, axis=1, keepdims=True)


if __name__ == "__main__":
    key = jax.random.PRNGKey(0)
    k1, k2, k3, k4, k5, k6 = jax.random.split(key, 6)

    num_quantiles = 9  # taus = 0.1 ... 0.9
    taus = jnp.linspace(0.1, 0.9, num_quantiles, dtype=jnp.float32)

    # Small case: batch smaller than one tile (single block, block rows == B).
    b1 = 16
    yp1 = jax.random.normal(k1, (b1, num_quantiles), dtype=jnp.float32)
    yt1 = jax.random.normal(k2, (b1, 1), dtype=jnp.float32)
    o1 = jax.block_until_ready(comparison_quantile_loss(yp1, yt1, taus))
    assert o1.shape == (b1, 1)
    assert jnp.allclose(o1, _reference(yp1, yt1, taus), atol=1e-5, rtol=1e-5), \
        "mismatch vs reference (small)"

    # Ragged multi-tile case (grid > 1, unpadded last block).
    b2 = 300
    yp2 = jax.random.normal(k3, (b2, num_quantiles), dtype=jnp.float32)
    yt2 = jax.random.normal(k4, (b2, 1), dtype=jnp.float32)
    o2 = jax.block_until_ready(
        comparison_quantile_loss(yp2, yt2, taus, batch_tile=128))
    assert o2.shape == (b2, 1)
    assert jnp.allclose(o2, _reference(yp2, yt2, taus), atol=1e-5, rtol=1e-5), \
        "mismatch vs reference (ragged multi-tile)"

    # Two-tile split heuristic (exercises the >=2-core sharding path).
    b3 = 1024
    yp3 = jax.random.normal(k5, (b3, num_quantiles), dtype=jnp.float32)
    yt3 = jax.random.normal(k6, (b3, 1), dtype=jnp.float32)
    o3 = jax.block_until_ready(comparison_quantile_loss(yp3, yt3, taus))
    assert o3.shape == (b3, 1)
    assert jnp.allclose(o3, _reference(yp3, yt3, taus), atol=1e-5, rtol=1e-5), \
        "mismatch vs reference (two-tile)"

    print("KERNEL_OK")
</pallas_src>

<mosaic_0001>
module attributes {stable_mosaic.version = 11 : i64} {
  func.func @_quantile_loss_kernel(%arg0: i32, %arg1: memref<1x9xf32, #tpu.memory_space<vmem>>, %arg2: memref<16x9xf32, #tpu.memory_space<vmem>>, %arg3: memref<16x1xf32, #tpu.memory_space<vmem>>, %arg4: memref<16x1xf32, #tpu.memory_space<vmem>>) attributes {dimension_semantics = [#tpu.dimension_semantics<parallel>], iteration_bounds = array<i64: 1>, scalar_prefetch = 0 : i64, scratch_operands = 0 : i64, tpu.core_type = #tpu.core_type<tc>, window_params = [{pipeline_mode = #tpu.pipeline_mode<synchronous>, transform_indices = @transform_0, window_bounds = array<i64: 1, 9>}, {transform_indices = @transform_1, window_bounds = array<i64: 16, 9>}, {transform_indices = @transform_2, window_bounds = array<i64: 16, 1>}, {transform_indices = @transform_3, window_bounds = array<i64: 16, 1>}]} {
    %c0 = arith.constant 0 : index
    %c0_0 = arith.constant 0 : index
    %0 = vector.load %arg1[%c0, %c0_0] : memref<1x9xf32, #tpu.memory_space<vmem>>, vector<1x9xf32>
    %c0_1 = arith.constant 0 : index
    %c0_2 = arith.constant 0 : index
    %1 = vector.load %arg2[%c0_1, %c0_2] : memref<16x9xf32, #tpu.memory_space<vmem>>, vector<16x9xf32>
    %c0_3 = arith.constant 0 : index
    %c0_4 = arith.constant 0 : index
    %2 = vector.load %arg3[%c0_3, %c0_4] : memref<16x1xf32, #tpu.memory_space<vmem>>, vector<16x1xf32>
    %3 = vector.broadcast %2 : vector<16x1xf32> to vector<16x9xf32>
    %4 = arith.subf %3, %1 : vector<16x9xf32>
    %5 = vector.broadcast %0 : vector<1x9xf32> to vector<16x9xf32>
    %6 = arith.mulf %5, %4 : vector<16x9xf32>
    %cst = arith.constant 0.000000e+00 : f32
    %7 = vector.broadcast %cst : f32 to vector<16x9xf32>
    %8 = arith.subf %7, %4 : vector<16x9xf32>
    %cst_5 = arith.constant 0.000000e+00 : f32
    %9 = vector.broadcast %cst_5 : f32 to vector<16x9xf32>
    %10 = arith.maximumf %8, %9 : vector<16x9xf32>
    %11 = arith.addf %6, %10 : vector<16x9xf32>
    %cst_6 = arith.constant dense<0.000000e+00> : vector<16xf32>
    %12 = vector.multi_reduction <add>, %11, %cst_6 [1] : vector<16x9xf32> to vector<16xf32>
    %13 = vector.shape_cast %12 : vector<16xf32> to vector<16x1xf32>
    %cst_7 = arith.constant 0.111111112 : f32
    %14 = vector.broadcast %cst_7 : f32 to vector<16x1xf32>
    %15 = arith.mulf %13, %14 : vector<16x1xf32>
    %c0_8 = arith.constant 0 : index
    %c0_9 = arith.constant 0 : index
    %16 = vector.load %arg4[%c0_8, %c0_9] : memref<16x1xf32, #tpu.memory_space<vmem>>, vector<16x1xf32>
    tpu.vector_store %arg4[%c0_8, %c0_9], %15 {strides = array<i32>} : memref<16x1xf32, #tpu.memory_space<vmem>>, vector<16x1xf32>,
    return
  }
  func.func @transform_0(%arg0: i32) -> (i32, i32) {
    %c0_i32 = arith.constant 0 : i32
    %c0_i32_0 = arith.constant 0 : i32
    %c0_i32_1 = arith.constant 0 : i32
    return %c0_i32, %c0_i32_0 : i32, i32
  }
  func.func @transform_1(%arg0: i32) -> (i32, i32) {
    %c0_i32 = arith.constant 0 : i32
    %c0_i32_0 = arith.constant 0 : i32
    return %arg0, %c0_i32 : i32, i32
  }
  func.func @transform_2(%arg0: i32) -> (i32, i32) {
    %c0_i32 = arith.constant 0 : i32
    %c0_i32_0 = arith.constant 0 : i32
    return %arg0, %c0_i32 : i32, i32
  }
  func.func @transform_3(%arg0: i32) -> (i32, i32) {
    %c0_i32 = arith.constant 0 : i32
    %c0_i32_0 = arith.constant 0 : i32
    return %arg0, %c0_i32 : i32, i32
  }
}

</mosaic_0001>

<llo_original>
// kernel: tpu_custom_call.1
$region0: #{tpu_custom_call.1}
  #allocation0 [shape = 'u32[]', space=smem, size = 0x4, offset = 0x4, fixed_abs, tag = 'smem constant byte address 0x4 - core index']
  #allocation1 [shape = 'u32[72,128]{1,0:T(1,128)}', space=vmem, size = 0x9000, scoped, tag = 'internal scratch']
  %s0 = inlined_call_operand.vmem [shape: f32[1,9], index: 0, kind: input, shape index: {}]
  %s1 = inlined_call_operand.vmem [shape: f32[16,9], index: 1, kind: input, shape index: {}]
  %s2 = inlined_call_operand.vmem [shape: f32[16,1], index: 2, kind: input, shape index: {}]
  %s3 = inlined_call_operand.vmem [shape: f32[16,1], index: 3, kind: output, shape index: {}]
  %s4 = sld [smem:[#allocation0]]
  $region22: #{tpu_custom_call.1} parent=0
    _
  %s6 = ssub.s32 1, %s4
  %s7 = scalar_select 0, %s6, %s4
  // Predicated region
  $region2: #{tpu_custom_call.1} parent=0 // pred_check
    _
  $region3: #{tpu_custom_call.1} parent=0 // pred_check_branch
    %9 = sbr.rel (0) target = $region5
  $region4: #{tpu_custom_call.1} parent=0 // pred_region
    _
  $region5: #{tpu_custom_call.1} parent=0 // pred_fallthru
    _
  // Predicated region
  $region6: #{tpu_custom_call.1} parent=0 // pred_check
    _
  $region7: #{tpu_custom_call.1} parent=0 // pred_check_branch
    %11 = sbr.rel (0) target = $region9
  $region8: #{tpu_custom_call.1} parent=0 // pred_region
    _
  $region9: #{tpu_custom_call.1} parent=0 // pred_fallthru
    _
  // Predicated region
  $region10: #{tpu_custom_call.1} parent=0 // pred_check
    _
  $region11: #{tpu_custom_call.1} parent=0 // pred_check_branch
    %13 = sbr.rel (0) target = $region13
  $region12: #{tpu_custom_call.1} parent=0 // pred_region
    _
  $region13: #{tpu_custom_call.1} parent=0 // pred_fallthru
    _
  %v14 = vld [vmem:[%s0] sm:$0x1]
  %v15 = vld [vmem:[%s1] sm:$0xff]
  %v16 = vld [vmem:[%s1 + $0x8] sm:$0xff]
  %v17 = vld [vmem:[%s2] sm:$0xff]
  %v18 = vld [vmem:[%s2 + $0x8] sm:$0xff]
  %20 = vset.pattern.permute.xlu0 0
  %21 = vperm.xlu0 %20, %v17
  %v22 = vpop.permute.xlu0 %21
  %25 = vset.pattern.permute.xlu0 0
  %26 = vperm.xlu0 %25, %v18
  %v27 = vpop.permute.xlu0 %26
  %v29 = vsub.f32 %v22, %v15
  %v30 = vsub.f32 %v27, %v16
  %v32 = vperm.slane %v14, 0
  %v34 = vmul.f32 %v32, %v29
  %v35 = vmul.f32 %v32, %v30
  %v36 = vsub.f32 0.0, %v29
  %v37 = vsub.f32 0.0, %v30
  %v38 = vmax.f32 %v36, 0.0
  %v39 = vmax.f32 %v37, 0.0
  %v40 = vadd.f32 %v34, %v38
  %v41 = vadd.f32 %v35, %v39
  %vm42 = vcmask 72704
  %v43 = vsel %vm42, %v40, 0.0
  %44 = vadd.xlane.f32.xlu0 %v43
  %v45 = vpop.xlane.xlu0 %44
  %v46 = vsel %vm42, %v41, 0.0
  %47 = vadd.xlane.f32.xlu0 %v46
  %v48 = vpop.xlane.xlu0 %47
  %v49 = vmul.f32 %v45, 0.11111111
  %v50 = vmul.f32 %v48, 0.11111111
  %vm51 = vcmask 7168
  %52 = vst.msk [vmem:[%s3] sm:$0xff] %vm51, %v49
  %53 = vst.msk [vmem:[%s3 + $0x8] sm:$0xff] %vm51, %v50
  // Predicated region
  $region14: #{tpu_custom_call.1} parent=0 // pred_check
    _
  $region15: #{tpu_custom_call.1} parent=0 // pred_check_branch
    %55 = sbr.rel (0) target = $region17
  $region16: #{tpu_custom_call.1} parent=0 // pred_region
    _
  $region17: #{tpu_custom_call.1} parent=0 // pred_fallthru
    _
  // Predicated region
  $region18: #{tpu_custom_call.1} parent=0 // pred_check
    _
  $region19: #{tpu_custom_call.1} parent=0 // pred_check_branch
    %57 = sbr.rel (0) target = $region21
  $region20: #{tpu_custom_call.1} parent=0 // pred_region
    _
  $region21: #{tpu_custom_call.1} parent=0 // pred_fallthru
    _

</llo_original>
